<compile_context>
chip_gen: v5e
topology: v5e:2x2
jax: 0.10.0
libtpu: 0.0.40
codegen_flags: <defaults>
</compile_context>

<pallas_src>
import functools

import jax
import jax.numpy as jnp
from jax.experimental import pallas as pl
from jax.experimental.pallas import tpu as pltpu


_NEG_BIG = -1e30  # finite "masked logit" sentinel (safe through max / exp)


def _round_up(x, m):
    return (x + m - 1) // m * m


def _device_kind():
    try:
        return jax.devices()[0].device_kind.lower()
    except Exception:
        return ""


def _is_newer_gen(kind):
    # v6e / v7x: 256-wide MXU, bf16 VPU/EUP paths.
    return any(t in kind for t in ("v6", "v7", "7x"))


def _pick_tiles(n, newer, block_rows=None, block_keys=None):
    tm_target = block_rows if block_rows is not None else (256 if newer else 128)
    tk_target = block_keys if block_keys is not None else 512
    if n <= tm_target:
        tm = tk = n_pad = max(16, _round_up(n, 16))     # single tile, mult of 16
    else:
        tm = tm_target
        n_pad = _round_up(n, tm)
        tk = min(tk_target, n_pad)
        while n_pad % tk:                               # keep key chunks dividing N_pad
            tk //= 2
    return tm, tk, n_pad


def _vmem_limit_bytes(tm, tk, f_pad, f_in_pad, kind):
    # Double-buffered pipeline blocks + scratch + in-flight (TM, TK) temporaries.
    est = (2 * tm * f_in_pad * 2          # stage-1 h tile
           + 2 * f_in_pad * f_pad * 2     # stage-1 W (constant block)
           + 4 * tm * f_pad * 2           # stage-1 out + stage-2 query tile
           + 2 * tk * f_pad * 2           # stage-2 key/value chunk
           + 2 * tk * 4                   # f2 row (lane-major)
           + 2 * tm * tk                  # adjacency chunk (int8)
           + 2 * tm * f_pad * 2           # stage-2 out
           + tm * f_pad * 4 + 4 * tm * 4  # f32 accumulator + running max/denom
           + 6 * tm * tk * 4)             # elementwise temporaries headroom
    cap = (48 << 20) if ("v7" in kind or "7x" in kind) else (100 << 20)
    return int(min(cap, max(32 << 20, 2 * est)))


def _project_kernel(h_ref, w_ref, wh_ref):
    # Wh tile = h tile @ W_p   (bf16 inputs, f32 MXU accumulation).
    # W_p's last two padded columns hold W@a1 / W@a2, so f1/f2 come out free.
    wh_ref[...] = jnp.dot(
        h_ref[...], w_ref[...], preferred_element_type=jnp.float32
    ).astype(wh_ref.dtype)


def _attention_kernel(wh_q_ref, wh_k_ref, f2t_ref, adj_ref, out_ref,
                      m_ref, l_ref, acc_ref, *,
                      alpha, concat, a1_col, softmax_dtype):
    k = pl.program_id(1)

    @pl.when(k == 0)
    def _init():
        m_ref[...] = jnp.full_like(m_ref, _NEG_BIG)
        l_ref[...] = jnp.zeros_like(l_ref)
        acc_ref[...] = jnp.zeros_like(acc_ref)

    # e[i, j] = LeakyReLU(f1[i] + f2[j]); f1 read from the query tile's folded
    # column, f2 arrives lane-major -> a single broadcast add, no transposes.
    f1 = wh_q_ref[:, a1_col:a1_col + 1].astype(jnp.float32)     # (TM, 1)
    f2 = f2t_ref[...]                                           # (1, TK) f32
    e = f1 + f2                                                 # (TM, TK)
    e = jnp.where(e > 0, e, alpha * e)                          # LeakyReLU(alpha)

    # Mask BEFORE the running max: disallowed logits neither dominate the max
    # nor overflow exp (review correctness fix).
    mask = adj_ref[...] > 0
    e = jnp.where(mask, e, _NEG_BIG)

    # Online-softmax update (flash pattern); normalization deferred to the end.
    m_prev = m_ref[...]
    m_new = jnp.maximum(m_prev, jnp.max(e, axis=1, keepdims=True))
    corr = jnp.exp(m_prev - m_new)                              # (TM, 1) f32
    p = jnp.exp((e - m_new).astype(softmax_dtype))              # bf16 EUP on v6e/v7x
    l_ref[...] = corr * l_ref[...] + jnp.sum(
        p.astype(jnp.float32), axis=1, keepdims=True)
    acc_ref[...] = corr * acc_ref[...] + jnp.dot(
        p.astype(wh_k_ref.dtype), wh_k_ref[...],
        preferred_element_type=jnp.float32)
    m_ref[...] = m_new

    # TODO(synk): F.dropout on the attention matrix is skipped (eval-mode
    # semantics); pltpu.prng_random_bits could supply a per-chunk keep-mask.

    @pl.when(k == pl.num_programs(1) - 1)
    def _finalize():
        # Deferred normalization: one F_pad-wide multiply, EUP approx reciprocal.
        h_prime = acc_ref[...] * pl.reciprocal(l_ref[...], approx=True)
        if concat:
            # ELU (alpha = 1.0, PyTorch default)
            h_prime = jnp.where(h_prime > 0, h_prime, jnp.exp(h_prime) - 1.0)
        out_ref[...] = h_prime.astype(out_ref.dtype)


def gat_sublayer(h, W, a, adj, *, alpha=0.2, concat=True,
                 block_rows=None, block_keys=None):
    """Pallas implementation of GATSubLayer.forward (dropout in eval mode)."""
    N, F_in = h.shape
    F_out = W.shape[1]
    kind = _device_kind()
    newer = _is_newer_gen(kind)

    F_in_pad = _round_up(F_in, 128)
    F_pad = _round_up(F_out, 128)
    if F_pad - F_out < 2:           # need two spare columns for W@a1 / W@a2
        F_pad += 128
    a1_col, a2_col = F_pad - 2, F_pad - 1

    TM, TK, N_pad = _pick_tiles(N, newer, block_rows, block_keys)
    softmax_dtype = jnp.bfloat16 if newer else jnp.float32
    vmem_limit = _vmem_limit_bytes(TM, TK, F_pad, F_in_pad, kind)

    # ---- padded operands (zero padding is exact) ---------------------------
    h_p = jnp.zeros((N_pad, F_in_pad), jnp.bfloat16)
    h_p = h_p.at[:N, :F_in].set(h.astype(jnp.bfloat16))

    W32 = W.astype(jnp.float32)
    a32 = a.astype(jnp.float32)
    W_p = jnp.zeros((F_in_pad, F_pad), jnp.float32)
    W_p = W_p.at[:F_in, :F_out].set(W32)
    # Fold attention-vector projections into the projection matmul.
    W_p = W_p.at[:F_in, a1_col].set(W32 @ a32[:F_out, 0])
    W_p = W_p.at[:F_in, a2_col].set(W32 @ a32[F_out:, 0])
    W_p = W_p.astype(jnp.bfloat16)

    # int8 adjacency; padded rows get a self-loop so their (discarded) rows
    # stay well-behaved.
    adj_mask = jnp.zeros((N_pad, N_pad), jnp.int8)
    adj_mask = adj_mask.at[:N, :N].set((adj > 0).astype(jnp.int8))
    if N_pad > N:
        pad_idx = jnp.arange(N, N_pad)
        adj_mask = adj_mask.at[pad_idx, pad_idx].set(1)

    # ---- stage 1: Wh = h @ W_p  (f1/f2 in the padded columns) --------------
    wh = pl.pallas_call(
        _project_kernel,
        out_shape=jax.ShapeDtypeStruct((N_pad, F_pad), jnp.bfloat16),
        grid_spec=pltpu.PrefetchScalarGridSpec(
            num_scalar_prefetch=0,
            grid=(N_pad // TM,),
            in_specs=[
                pl.BlockSpec((TM, F_in_pad), lambda i: (i, 0)),
                pl.BlockSpec((F_in_pad, F_pad), lambda i: (0, 0)),
            ],
            out_specs=pl.BlockSpec((TM, F_pad), lambda i: (i, 0)),
        ),
        compiler_params=pltpu.CompilerParams(
            dimension_semantics=("parallel",),
            vmem_limit_bytes=vmem_limit),
    )(h_p, W_p)

    # f2 re-laid out lane-major ONCE (single column slice of stage-1 output),
    # so the attention kernel never performs a per-stripe cross-lane transpose.
    f2t = wh[:, a2_col].astype(jnp.float32).reshape(1, N_pad)

    # ---- stage 2: flash-style attention + aggregation ----------------------
    kernel = functools.partial(
        _attention_kernel, alpha=alpha, concat=concat,
        a1_col=a1_col, softmax_dtype=softmax_dtype)
    out = pl.pallas_call(
        kernel,
        out_shape=jax.ShapeDtypeStruct((N_pad, F_pad), jnp.bfloat16),
        grid_spec=pltpu.PrefetchScalarGridSpec(
            num_scalar_prefetch=0,
            grid=(N_pad // TM, N_pad // TK),
            in_specs=[
                pl.BlockSpec((TM, F_pad), lambda i, k: (i, 0)),   # Wh query tile
                pl.BlockSpec((TK, F_pad), lambda i, k: (k, 0)),   # Wh key/value chunk
                pl.BlockSpec((1, TK), lambda i, k: (0, k)),       # f2 row (lane-major)
                pl.BlockSpec((TM, TK), lambda i, k: (i, k)),      # adjacency chunk
            ],
            out_specs=pl.BlockSpec((TM, F_pad), lambda i, k: (i, 0)),
            scratch_shapes=[
                pltpu.VMEM((TM, 1), jnp.float32),       # running max
                pltpu.VMEM((TM, 1), jnp.float32),       # running denom
                pltpu.VMEM((TM, F_pad), jnp.float32),   # unnormalized output acc
            ],
        ),
        compiler_params=pltpu.CompilerParams(
            dimension_semantics=("parallel", "arbitrary"),
            vmem_limit_bytes=vmem_limit),
    )(wh, wh, f2t, adj_mask)

    # TODO(synk): a row with no allowed neighbours yields a finite uniform
    # average here instead of PyTorch's degenerate softmax over -9e15 logits
    # (irrelevant when self-loops are present, as in standard GAT usage).
    return out[:N, :F_out].astype(h.dtype)


def xavier_uniform(key, shape, gain):
    fan_in, fan_out = shape[0], shape[1]
    bound = gain * jnp.sqrt(6.0 / (fan_in + fan_out))
    return jax.random.uniform(key, shape, jnp.float32, -bound, bound)


def gat_reference(h, W, a, adj, *, alpha=0.2, concat=True):
    """Pure-JAX f32 reference mirroring the PyTorch forward (dropout off)."""
    wh = h @ W
    out_features = W.shape[1]
    f1 = wh @ a[:out_features]
    f2 = wh @ a[out_features:]
    e = f1 + f2.T
    e = jnp.where(e > 0, e, alpha * e)
    att = jnp.where(adj > 0, e, jnp.full_like(e, -9.0e15))
    att = jax.nn.softmax(att, axis=1)
    h_prime = att @ wh
    if concat:
        h_prime = jnp.where(h_prime > 0, h_prime, jnp.exp(h_prime) - 1.0)
    return h_prime


def _run_case(key, n, f_in, f_out, *, alpha, concat, atol, rtol, **tile_kwargs):
    k_w, k_a, k_h, k_adj = jax.random.split(key, 4)
    W = xavier_uniform(k_w, (f_in, f_out), gain=1.414)
    a = xavier_uniform(k_a, (2 * f_out, 1), gain=1.414)
    h = jax.random.normal(k_h, (n, f_in), dtype=jnp.float32)
    adj = (jax.random.uniform(k_adj, (n, n)) > 0.5).astype(jnp.float32)
    adj = jnp.maximum(adj, jnp.eye(n, dtype=jnp.float32))

    out = gat_sublayer(h, W, a, adj, alpha=alpha, concat=concat, **tile_kwargs)
    out = jax.block_until_ready(out)
    ref = gat_reference(h, W, a, adj, alpha=alpha, concat=concat)
    assert out.shape == (n, f_out)
    err = float(jnp.max(jnp.abs(out - ref)))
    assert jnp.allclose(out, ref, atol=atol, rtol=rtol), (
        f"mismatch vs reference (N={n}): max abs err {err}")
    return out


if __name__ == "__main__":
    key = jax.random.PRNGKey(0)
    k1, k2 = jax.random.split(key)

    # Small, module-consistent shapes: 8 nodes, 16 -> 32 features.
    _run_case(k1, 8, 16, 32, alpha=0.2, concat=True, atol=5e-2, rtol=5e-2)

    # Slightly larger case exercising the multi-tile online-softmax path
    # (forced 128x128 tiles -> 3x3 stage-2 grid with masked key chunks).
    _run_case(k2, 300, 24, 48, alpha=0.2, concat=True, atol=7.5e-2, rtol=7.5e-2,
              block_rows=128, block_keys=128)

    print("KERNEL_OK")
</pallas_src>

<mosaic_0001>
module attributes {stable_mosaic.version = 11 : i64} {
  func.func @_project_kernel(%arg0: i32, %arg1: memref<16x128xbf16, #tpu.memory_space<vmem>>, %arg2: memref<128x128xbf16, #tpu.memory_space<vmem>>, %arg3: memref<16x128xbf16, #tpu.memory_space<vmem>>) attributes {dimension_semantics = [#tpu.dimension_semantics<parallel>], iteration_bounds = array<i64: 1>, scalar_prefetch = 0 : i64, scratch_operands = 0 : i64, tpu.core_type = #tpu.core_type<tc>, window_params = [{transform_indices = @transform_0, window_bounds = array<i64: 16, 128>}, {pipeline_mode = #tpu.pipeline_mode<synchronous>, transform_indices = @transform_1, window_bounds = array<i64: 128, 128>}, {transform_indices = @transform_2, window_bounds = array<i64: 16, 128>}]} {
    %c0 = arith.constant 0 : index
    %c0_0 = arith.constant 0 : index
    %0 = vector.load %arg1[%c0, %c0_0] : memref<16x128xbf16, #tpu.memory_space<vmem>>, vector<16x128xbf16>
    %c0_1 = arith.constant 0 : index
    %c0_2 = arith.constant 0 : index
    %1 = vector.load %arg2[%c0_1, %c0_2] : memref<128x128xbf16, #tpu.memory_space<vmem>>, vector<128x128xbf16>
    %cst = arith.constant dense<0.000000e+00> : vector<16x128xf32>
    %2 = tpu.matmul %0, %1, %cst {dimension_numbers = #tpu.dot_dimension_numbers<[1], [0], [0], [1], [0, 0, 1, 1], [], []>} : vector<16x128xbf16>, vector<128x128xbf16>, vector<16x128xf32> -> vector<16x128xf32>
    %3 = arith.truncf %2 : vector<16x128xf32> to vector<16x128xbf16>
    %c0_3 = arith.constant 0 : index
    %c0_4 = arith.constant 0 : index
    %4 = vector.load %arg3[%c0_3, %c0_4] : memref<16x128xbf16, #tpu.memory_space<vmem>>, vector<16x128xbf16>
    tpu.vector_store %arg3[%c0_3, %c0_4], %3 {strides = array<i32>} : memref<16x128xbf16, #tpu.memory_space<vmem>>, vector<16x128xbf16>,
    return
  }
  func.func @transform_0(%arg0: i32) -> (i32, i32) {
    %c0_i32 = arith.constant 0 : i32
    %c0_i32_0 = arith.constant 0 : i32
    return %arg0, %c0_i32 : i32, i32
  }
  func.func @transform_1(%arg0: i32) -> (i32, i32) {
    %c0_i32 = arith.constant 0 : i32
    %c0_i32_0 = arith.constant 0 : i32
    %c0_i32_1 = arith.constant 0 : i32
    return %c0_i32, %c0_i32_0 : i32, i32
  }
  func.func @transform_2(%arg0: i32) -> (i32, i32) {
    %c0_i32 = arith.constant 0 : i32
    %c0_i32_0 = arith.constant 0 : i32
    return %arg0, %c0_i32 : i32, i32
  }
}

</mosaic_0001>

<llo_original>
// kernel: tpu_custom_call.1
$region0: #{tpu_custom_call.1}
  #allocation0 [shape = 'u32[]', space=smem, size = 0x4, offset = 0x4, fixed_abs, tag = 'smem constant byte address 0x4 - core index']
  #allocation1 [shape = 'u32[72,128]{1,0:T(1,128)}', space=vmem, size = 0x9000, scoped, tag = 'internal scratch']
  %s0 = inlined_call_operand.hbm [shape: bf16[16,128], index: 0, kind: input, shape index: {}]
  %s1 = inlined_call_operand.hbm [shape: bf16[128,128], index: 1, kind: input, shape index: {}]
  %s2 = inlined_call_operand.hbm [shape: bf16[16,128], index: 2, kind: output, shape index: {}]
  %s3 = sld [smem:[#allocation0]]
  $region26: #{tpu_custom_call.1} parent=0
    _
  %s5 = ssub.s32 1, %s3
  %s6 = scalar_select 0, %s5, %s3
  $region1: #{tpu_custom_call.1} parent=0
    #allocation2 [shape = 'u8[4096]{0}', space=vmem, size = 0x1000, scoped, tag = 'input window, operand 0, single buffered']
    #allocation3 [shape = 's32[1]{0}', space=sflag, size = 0x4, scoped, tag = 'scoped memory for tpu_custom_call.1']
    #allocation4 [shape = 's32[1]{0}', space=sflag, size = 0x4, scoped, tag = 'scoped memory for tpu_custom_call.1']
    #allocation5 [shape = 'u8[32768]{0}', space=vmem, size = 0x8000, scoped, tag = 'input window, operand 1, single buffered']
    #allocation6 [shape = 's32[1]{0}', space=sflag, size = 0x4, scoped, tag = 'scoped memory for tpu_custom_call.1']
    #allocation7 [shape = 'u8[4096]{0}', space=vmem, size = 0x1000, scoped, tag = 'output window, operand 0, single buffered']
    %7 = vsyncpa [#allocation3], 0
    %8 = vsyncpa [#allocation6], 0
    %9 = vsyncpa [#allocation4], 0
    // Predicated region
    $region2: #{tpu_custom_call.1} parent=1 // pred_check
      _
    $region3: #{tpu_custom_call.1} parent=1 // pred_check_branch
      %11 = sbr.rel (0) target = $region5
    $region4: #{tpu_custom_call.1} parent=1 // pred_region
      %13 = vsyncadd [#allocation3], 0
      %s14 = sshll.u32 %s0, 4
      %s15 = int_to_ptr.hbm [resolvable:$true] %s14
      %s16 = sshll.u32 [#allocation2], 4
      %s17 = int_to_ptr.vmem [resolvable:$true] %s16
      %22 = dma.hbm_to_vmem [thread:$0]  %s15, 128, %s17, [#allocation3], 64, 64, 4
    $region5: #{tpu_custom_call.1} parent=1 // pred_fallthru
      _
    // Predicated region
    $region6: #{tpu_custom_call.1} parent=1 // pred_check
      _
    $region7: #{tpu_custom_call.1} parent=1 // pred_check_branch
      %24 = sbr.rel (0) target = $region9
    $region8: #{tpu_custom_call.1} parent=1 // pred_region
      %26 = vsyncadd [#allocation6], 0
      %s27 = sshll.u32 %s1, 4
      %s28 = int_to_ptr.hbm [resolvable:$true] %s27
      %s29 = sshll.u32 [#allocation5], 4
      %s30 = int_to_ptr.vmem [resolvable:$true] %s29
      %35 = dma.hbm_to_vmem [thread:$0]  %s28, 1024, %s30, [#allocation6], 64, 64, 4
    $region9: #{tpu_custom_call.1} parent=1 // pred_fallthru
      _
    // Predicated region
    $region10: #{tpu_custom_call.1} parent=1 // pred_check
      _
    $region11: #{tpu_custom_call.1} parent=1 // pred_check_branch
      %37 = sbr.rel (0) target = $region13
    $region12: #{tpu_custom_call.1} parent=1 // pred_region
      %39 = dma.done [#allocation3], 128
    $region13: #{tpu_custom_call.1} parent=1 // pred_fallthru
      _
    // Predicated region
    $region14: #{tpu_custom_call.1} parent=1 // pred_check
      _
    $region15: #{tpu_custom_call.1} parent=1 // pred_check_branch
      %41 = sbr.rel (0) target = $region17
    $region16: #{tpu_custom_call.1} parent=1 // pred_region
      %43 = dma.done [#allocation6], 1024
    $region17: #{tpu_custom_call.1} parent=1 // pred_fallthru
      _
    %v44 = vld [vmem:[#allocation2] sm:$0xf]
    %v45 = vld [vmem:[#allocation2 + $0x4] sm:$0xf]
    %v46 = vld [vmem:[#allocation5] sm:$0xf]
    %v47 = vld [vmem:[#allocation5 + $0x4] sm:$0xf]
    %v48 = vld [vmem:[#allocation5 + $0x8] sm:$0xf]
    %v49 = vld [vmem:[#allocation5 + $0xc] sm:$0xf]
    %v50 = vld [vmem:[#allocation5 + $0x10] sm:$0xf]
    %v51 = vld [vmem:[#allocation5 + $0x14] sm:$0xf]
    %v52 = vld [vmem:[#allocation5 + $0x18] sm:$0xf]
    %v53 = vld [vmem:[#allocation5 + $0x1c] sm:$0xf]
    %v54 = vld [vmem:[#allocation5 + $0x20] sm:$0xf]
    %v55 = vld [vmem:[#allocation5 + $0x24] sm:$0xf]
    %v56 = vld [vmem:[#allocation5 + $0x28] sm:$0xf]
    %v57 = vld [vmem:[#allocation5 + $0x2c] sm:$0xf]
    %v58 = vld [vmem:[#allocation5 + $0x30] sm:$0xf]
    %v59 = vld [vmem:[#allocation5 + $0x34] sm:$0xf]
    %v60 = vld [vmem:[#allocation5 + $0x38] sm:$0xf]
    %v61 = vld [vmem:[#allocation5 + $0x3c] sm:$0xf]
    %v64 = vunpack.c.l.b16 %v44
    %v65 = vunpack.c.l.b16 %v45
    %v66 = vpack.c.b16 %v65, %v64
    %v84 = vunpack.c.l.b16 %v46
    %v85 = vunpack.c.l.b16 %v47
    %v86 = vunpack.c.l.b16 %v48
    %v87 = vunpack.c.l.b16 %v49
    %v88 = vunpack.c.l.b16 %v50
    %v89 = vunpack.c.l.b16 %v51
    %v90 = vunpack.c.l.b16 %v52
    %v91 = vunpack.c.l.b16 %v53
    %v92 = vunpack.c.l.b16 %v54
    %v93 = vunpack.c.l.b16 %v55
    %v94 = vunpack.c.l.b16 %v56
    %v95 = vunpack.c.l.b16 %v57
    %v96 = vunpack.c.l.b16 %v58
    %v97 = vunpack.c.l.b16 %v59
    %v98 = vunpack.c.l.b16 %v60
    %v99 = vunpack.c.l.b16 %v61
    %v100 = vpack.c.b16 %v85, %v84
    %v101 = vpack.c.b16 %v87, %v86
    %v102 = vpack.c.b16 %v89, %v88
    %v103 = vpack.c.b16 %v91, %v90
    %v104 = vpack.c.b16 %v93, %v92
    %v105 = vpack.c.b16 %v95, %v94
    %v106 = vpack.c.b16 %v97, %v96
    %v107 = vpack.c.b16 %v99, %v98
    %116 = vmatpush.bf16.msra.mxu0 %v107
    %117 = vmatpush.bf16.msra.mxu0 %v106
    %118 = vmatpush.bf16.msra.mxu0 %v105
    %119 = vmatpush.bf16.msra.mxu0 %v104
    %120 = vmatpush.bf16.msra.mxu0 %v103
    %121 = vmatpush.bf16.msra.mxu0 %v102
    %122 = vmatpush.bf16.msra.mxu0 %v101
    %123 = vmatpush.bf16.msra.mxu0 %v100
    %124 = vmatmul.bf16.gmra.mxu0 %v66
    %v125 = vpop.f32.mrf.mxu0
    %v126 = vadd.f32 0.0, %v125
    %v127 = vpop.f32.mrf.mxu0
    %v128 = vadd.f32 0.0, %v127
    %129 = vdwg.mxu0
    %v130 = vpack.c.bf16 %v126, %v126
    %v131 = vpack.c.bf16 %v128, %v128
    %132 = vst [vmem:[#allocation7] sm:$0xf] %v130
    %133 = vst [vmem:[#allocation7 + $0x4] sm:$0xf] %v131
    // Predicated region
    $region18: #{tpu_custom_call.1} parent=1 // pred_check
      _
    $region19: #{tpu_custom_call.1} parent=1 // pred_check_branch
      %135 = sbr.rel (0) target = $region21
    $region20: #{tpu_custom_call.1} parent=1 // pred_region
      %137 = vsyncadd [#allocation4], 0
      %s138 = sshll.u32 [#allocation7], 4
      %s139 = int_to_ptr.vmem [resolvable:$true] %s138
      %s140 = sshll.u32 %s2, 4
      %s141 = int_to_ptr.hbm [resolvable:$true] %s140
      %146 = dma.vmem_to_hbm [thread:$0]  %s139, 128, %s141, [#allocation4], 64, 64, 4
    $region21: #{tpu_custom_call.1} parent=1 // pred_fallthru
      _
    // Predicated region
    $region22: #{tpu_custom_call.1} parent=1 // pred_check
      _
    $region23: #{tpu_custom_call.1} parent=1 // pred_check_branch
      %148 = sbr.rel (0) target = $region25
    $region24: #{tpu_custom_call.1} parent=1 // pred_region
      %150 = dma.done [#allocation4], 128
    $region25: #{tpu_custom_call.1} parent=1 // pred_fallthru
      _
    %151 = vsyncpa [#allocation3], 1
    %152 = vsyncpa [#allocation6], 1
    %153 = vsyncpa [#allocation4], 1

</llo_original>
